<compile_context>
chip_gen: v6e
topology: v6e:2x2x1
jax: 0.10.0
libtpu: 0.0.40
codegen_flags: <defaults>
</compile_context>

<pallas_src>
import jax
import jax.numpy as jnp
from jax.experimental import pallas as pl
from jax.experimental.pallas import tpu as pltpu

_LANES = 128  # lane width of the 2-D interleaved view


def _interleaved_linear2x2_kernel(w_ref, b_ref, x_ref, o_ref):
    """Linear(2, 2) on an interleaved flat layout.

    x_ref / o_ref : VMEM (TR, 128) tiles of the row-major flat view of x / y.
      Even lanes hold feature 0, odd lanes hold feature 1 of the same batch row
      (pairs never straddle a row of 128 lanes since 128 is even).
    w_ref : SMEM (4,)  scalars [w00, w01, w10, w11] (row-major [out, in])
    b_ref : SMEM (2,)  scalars [b0, b1]
    """
    xv = x_ref[...]                                     # (TR, 128)
    lanes = xv.shape[-1]
    # out[i] = in[i+1]  (wrap only reaches lanes of the wrong parity -> masked out)
    x_next = pltpu.roll(xv, shift=lanes - 1, axis=1)
    # out[i] = in[i-1]
    x_prev = pltpu.roll(xv, shift=1, axis=1)

    lane_idx = jax.lax.broadcasted_iota(jnp.int32, xv.shape, 1)
    is_feat0 = (lane_idx & 1) == 0

    w00 = w_ref[0]
    w01 = w_ref[1]
    w10 = w_ref[2]
    w11 = w_ref[3]

    # Even lane i = 2k:   y_{k,0} = w00*x_{k,0} + w01*x_{k,1} + b0  (xv, x_next)
    # Odd  lane i = 2k+1: y_{k,1} = w10*x_{k,0} + w11*x_{k,1} + b1  (x_prev, xv)
    y_f0 = xv * w00 + x_next * w01 + b_ref[0]
    y_f1 = x_prev * w10 + xv * w11 + b_ref[1]
    o_ref[...] = jnp.where(is_feat0, y_f0, y_f1)


def reg_model_forward(x, w, b, *, max_rows_per_block: int = 2048):
    """Equivalent of RegModel.forward: y = x @ w.T + b for nn.Linear(2, 2)."""
    n, f_in = x.shape
    f_out = w.shape[0]
    assert f_in == 2 and f_out == 2, "kernel is specialized to Linear(2, 2)"

    # Row-major flat view: [x00, x01, x10, x11, ...] -- free reshape, no transpose.
    flat = x.reshape(-1)
    F = flat.shape[0]
    F_pad = pl.cdiv(F, _LANES) * _LANES
    if F_pad != F:
        flat = jnp.pad(flat, (0, F_pad - F))            # only copies when unaligned
    R = F_pad // _LANES
    x2d = flat.reshape(R, _LANES)                       # free, row-major

    # Row-tile size: multiple of 8 sublanes, or the full extent for small inputs.
    tr = R if R < max_rows_per_block else max_rows_per_block
    grid = (pl.cdiv(R, tr),)

    w_flat = w.reshape(-1).astype(x.dtype)              # (4,) [w00, w01, w10, w11]
    b_flat = b.astype(x.dtype)                          # (2,)

    out2d = pl.pallas_call(
        _interleaved_linear2x2_kernel,
        out_shape=jax.ShapeDtypeStruct((R, _LANES), x.dtype),
        grid=grid,
        in_specs=[
            pl.BlockSpec(memory_space=pltpu.MemorySpace.SMEM),   # weights (scalars)
            pl.BlockSpec(memory_space=pltpu.MemorySpace.SMEM),   # bias (scalars)
            pl.BlockSpec((tr, _LANES), lambda r: (r, 0)),        # x tile
        ],
        out_specs=pl.BlockSpec((tr, _LANES), lambda r: (r, 0)),
        compiler_params=pltpu.CompilerParams(
            dimension_semantics=("parallel",),
        ),
        cost_estimate=pl.CostEstimate(
            flops=2 * n * f_in * f_out,
            transcendentals=0,
            bytes_accessed=4 * (2 * F_pad + w_flat.size + b_flat.size),
        ),
    )(w_flat, b_flat, x2d)

    out_flat = out2d.reshape(-1)
    if F_pad != F:
        out_flat = out_flat[:F]
    return out_flat.reshape(n, f_out)


if __name__ == "__main__":
    key = jax.random.PRNGKey(0)
    k_x, k_w, k_b, k_x2, k_x3 = jax.random.split(key, 5)

    in_features, out_features = 2, 2

    # Deterministic parameter init mimicking PyTorch Linear's default
    # U(-1/sqrt(in_features), 1/sqrt(in_features)) distribution.
    bound = 1.0 / jnp.sqrt(jnp.float32(in_features))
    w = jax.random.uniform(k_w, (out_features, in_features), jnp.float32, -bound, bound)
    b = jax.random.uniform(k_b, (out_features,), jnp.float32, -bound, bound)

    # Small batch (single full-extent block, padded to one 128-lane row).
    x = jax.random.normal(k_x, (8, in_features), jnp.float32)
    y = reg_model_forward(x, w, b)
    jax.block_until_ready(y)
    y_ref = x @ w.T + b
    assert y.shape == (8, out_features)
    assert jnp.allclose(y, y_ref, atol=1e-5, rtol=1e-5)

    # Non-multiple batch exercises the lane-padding path.
    x2 = jax.random.normal(k_x2, (1000, in_features), jnp.float32)
    y2 = reg_model_forward(x2, w, b)
    jax.block_until_ready(y2)
    y2_ref = x2 @ w.T + b
    assert y2.shape == (1000, out_features)
    assert jnp.allclose(y2, y2_ref, atol=1e-5, rtol=1e-5)

    # Larger batch exercises the multi-block grid path (partial last block masked).
    x3 = jax.random.normal(k_x3, (200_000, in_features), jnp.float32)
    y3 = reg_model_forward(x3, w, b)
    jax.block_until_ready(y3)
    y3_ref = x3 @ w.T + b
    assert y3.shape == (200_000, out_features)
    assert jnp.allclose(y3, y3_ref, atol=1e-5, rtol=1e-5)

    print("KERNEL_OK")
</pallas_src>

<mosaic_0001>
module attributes {stable_mosaic.version = 11 : i64} {
  func.func @_interleaved_linear2x2_kernel(%arg0: i32, %arg1: memref<4xf32, #tpu.memory_space<smem>>, %arg2: memref<2xf32, #tpu.memory_space<smem>>, %arg3: memref<1x128xf32, #tpu.memory_space<vmem>>, %arg4: memref<1x128xf32, #tpu.memory_space<vmem>>) attributes {dimension_semantics = [#tpu.dimension_semantics<parallel>], iteration_bounds = array<i64: 1>, scalar_prefetch = 0 : i64, scratch_operands = 0 : i64, tpu.core_type = #tpu.core_type<tc>, window_params = [{transform_indices = @transform_0, window_bounds = array<i64: 4>}, {transform_indices = @transform_1, window_bounds = array<i64: 2>}, {transform_indices = @transform_2, window_bounds = array<i64: 1, 128>}, {transform_indices = @transform_3, window_bounds = array<i64: 1, 128>}]} {
    %c0 = arith.constant 0 : index
    %c0_0 = arith.constant 0 : index
    %0 = vector.load %arg3[%c0, %c0_0] : memref<1x128xf32, #tpu.memory_space<vmem>>, vector<1x128xf32>
    %c127_i32 = arith.constant 127 : i32
    %1 = tpu.dynamic_rotate %0 by %c127_i32 dim 1 : vector<1x128xf32>, i32 -> vector<1x128xf32>
    %c1_i32 = arith.constant 1 : i32
    %2 = tpu.dynamic_rotate %0 by %c1_i32 dim 1 : vector<1x128xf32>, i32 -> vector<1x128xf32>
    %3 = tpu.iota {dimensions = array<i32: 1>} : vector<1x128xi32>
    %c1_i32_1 = arith.constant 1 : i32
    %4 = vector.broadcast %c1_i32_1 : i32 to vector<1x128xi32>
    %5 = arith.andi %3, %4 : vector<1x128xi32>
    %c0_i32 = arith.constant 0 : i32
    %6 = vector.broadcast %c0_i32 : i32 to vector<1x128xi32>
    %7 = arith.cmpi eq, %5, %6 : vector<1x128xi32>
    %c0_2 = arith.constant 0 : index
    %8 = memref.load %arg1[%c0_2] : memref<4xf32, #tpu.memory_space<smem>>
    %c1 = arith.constant 1 : index
    %9 = memref.load %arg1[%c1] : memref<4xf32, #tpu.memory_space<smem>>
    %c2 = arith.constant 2 : index
    %10 = memref.load %arg1[%c2] : memref<4xf32, #tpu.memory_space<smem>>
    %c3 = arith.constant 3 : index
    %11 = memref.load %arg1[%c3] : memref<4xf32, #tpu.memory_space<smem>>
    %12 = vector.broadcast %8 : f32 to vector<1x128xf32>
    %13 = arith.mulf %0, %12 : vector<1x128xf32>
    %14 = vector.broadcast %9 : f32 to vector<1x128xf32>
    %15 = arith.mulf %1, %14 : vector<1x128xf32>
    %16 = arith.addf %13, %15 : vector<1x128xf32>
    %c0_3 = arith.constant 0 : index
    %17 = memref.load %arg2[%c0_3] : memref<2xf32, #tpu.memory_space<smem>>
    %18 = vector.broadcast %17 : f32 to vector<1x128xf32>
    %19 = arith.addf %16, %18 : vector<1x128xf32>
    %20 = vector.broadcast %10 : f32 to vector<1x128xf32>
    %21 = arith.mulf %2, %20 : vector<1x128xf32>
    %22 = vector.broadcast %11 : f32 to vector<1x128xf32>
    %23 = arith.mulf %0, %22 : vector<1x128xf32>
    %24 = arith.addf %21, %23 : vector<1x128xf32>
    %c1_4 = arith.constant 1 : index
    %25 = memref.load %arg2[%c1_4] : memref<2xf32, #tpu.memory_space<smem>>
    %26 = vector.broadcast %25 : f32 to vector<1x128xf32>
    %27 = arith.addf %24, %26 : vector<1x128xf32>
    %28 = arith.select %7, %19, %27 : vector<1x128xi1>, vector<1x128xf32>
    %c0_5 = arith.constant 0 : index
    %c0_6 = arith.constant 0 : index
    %29 = vector.load %arg4[%c0_5, %c0_6] : memref<1x128xf32, #tpu.memory_space<vmem>>, vector<1x128xf32>
    tpu.vector_store %arg4[%c0_5, %c0_6], %28 {strides = array<i32>} : memref<1x128xf32, #tpu.memory_space<vmem>>, vector<1x128xf32>,
    return
  }
  func.func @transform_0(%arg0: i32) -> i32 {
    %c0_i32 = arith.constant 0 : i32
    %c0_i32_0 = arith.constant 0 : i32
    return %c0_i32 : i32
  }
  func.func @transform_1(%arg0: i32) -> i32 {
    %c0_i32 = arith.constant 0 : i32
    %c0_i32_0 = arith.constant 0 : i32
    return %c0_i32 : i32
  }
  func.func @transform_2(%arg0: i32) -> (i32, i32) {
    %c0_i32 = arith.constant 0 : i32
    %c0_i32_0 = arith.constant 0 : i32
    return %arg0, %c0_i32 : i32, i32
  }
  func.func @transform_3(%arg0: i32) -> (i32, i32) {
    %c0_i32 = arith.constant 0 : i32
    %c0_i32_0 = arith.constant 0 : i32
    return %arg0, %c0_i32 : i32, i32
  }
}

</mosaic_0001>

<llo_original>
// kernel: tpu_custom_call.1
$region0: #{tpu_custom_call.1}
  #allocation0 [shape = 'u32[]', space=smem, size = 0x4, offset = 0x4, fixed_abs, tag = 'smem constant byte address 0x4 - core index']
  #allocation1 [shape = 'u32[144,128]{1,0:T(1,128)}', space=vmem, size = 0x12000, scoped, tag = 'internal scratch']
  %s0 = inlined_call_operand.hbm [shape: f32[4], index: 0, kind: input, shape index: {}]
  %s1 = inlined_call_operand.vmem [shape: f32[2], index: 1, kind: input, shape index: {}]
  %s2 = inlined_call_operand.vmem [shape: f32[1,128], index: 2, kind: input, shape index: {}]
  %s3 = inlined_call_operand.hbm [shape: f32[1,128], index: 3, kind: output, shape index: {}]
  %s4 = sld [smem:[#allocation0]]
  $region30: #{tpu_custom_call.1} parent=0
    _
  %s6 = ssub.s32 1, %s4
  %s7 = scalar_select 0, %s6, %s4
  $region1: #{tpu_custom_call.1} parent=0
    #allocation2 [shape = 'u8[512]{0}', space=smem, size = 0x200, scoped, tag = 'input window, operand 0, single buffered']
    #allocation3 [shape = 's32[1]{0}', space=sflag, size = 0x4, scoped, tag = 'scoped memory for tpu_custom_call.1']
    #allocation4 [shape = 's32[1]{0}', space=sflag, size = 0x4, scoped, tag = 'scoped memory for tpu_custom_call.1']
    #allocation5 [shape = 's32[1]{0}', space=sflag, size = 0x4, scoped, tag = 'scoped memory for tpu_custom_call.1']
    #allocation6 [shape = 'u8[512]{0}', space=smem, size = 0x200, scoped, tag = 'input window, operand 1, single buffered']
    #allocation7 [shape = 'u8[512]{0}', space=vmem, size = 0x400, scoped, tag = 'output window, operand 0, single buffered']
    %8 = vsyncpa [#allocation4], 0
    %9 = vsyncpa [#allocation5], 0
    %10 = vsyncpa [#allocation3], 0
    // Predicated region
    $region2: #{tpu_custom_call.1} parent=1 // pred_check
      _
    $region3: #{tpu_custom_call.1} parent=1 // pred_check_branch
      %12 = sbr.rel (0) target = $region5
    $region4: #{tpu_custom_call.1} parent=1 // pred_region
      %s14 = ssub.s32 16, 16
      %15 = vsyncadd [#allocation4], %s14
      %18 = dma.hbm_to_smem %s0, 16, [#allocation2], [#allocation4]
    $region5: #{tpu_custom_call.1} parent=1 // pred_fallthru
      _
    // Predicated region
    $region6: #{tpu_custom_call.1} parent=1 // pred_check
      _
    $region7: #{tpu_custom_call.1} parent=1 // pred_check_branch
      %20 = sbr.rel (0) target = $region9
    $region8: #{tpu_custom_call.1} parent=1 // pred_region
      %s22 = ssub.s32 16, 16
      %23 = vsyncadd [#allocation5], %s22
      %s25 = sshll.u32 %s1, 4
      %s26 = int_to_ptr.vmem [resolvable:$true] %s25
      %28 = dma.vmem_to_smem %s26, 16, [#allocation6], [#allocation5]
    $region9: #{tpu_custom_call.1} parent=1 // pred_fallthru
      _
    // Predicated region
    $region10: #{tpu_custom_call.1} parent=1 // pred_check
      _
    $region11: #{tpu_custom_call.1} parent=1 // pred_check_branch
      %30 = sbr.rel (0) target = $region13
    $region12: #{tpu_custom_call.1} parent=1 // pred_region
      _
    $region13: #{tpu_custom_call.1} parent=1 // pred_fallthru
      _
    // Predicated region
    $region14: #{tpu_custom_call.1} parent=1 // pred_check
      _
    $region15: #{tpu_custom_call.1} parent=1 // pred_check_branch
      %32 = sbr.rel (0) target = $region17
    $region16: #{tpu_custom_call.1} parent=1 // pred_region
      %33 = dma.done [#allocation4], 16
    $region17: #{tpu_custom_call.1} parent=1 // pred_fallthru
      _
    // Predicated region
    $region18: #{tpu_custom_call.1} parent=1 // pred_check
      _
    $region19: #{tpu_custom_call.1} parent=1 // pred_check_branch
      %35 = sbr.rel (0) target = $region21
    $region20: #{tpu_custom_call.1} parent=1 // pred_region
      %36 = dma.done [#allocation5], 16
    $region21: #{tpu_custom_call.1} parent=1 // pred_fallthru
      _
    %37 = sfence
    %v38 = vld [vmem:[%s2] sm:$0x1]
    %39 = vrot.lane.b32.xlu0 %v38, 127
    %v40 = vpop.permute.xlu0 %39
    %41 = vrot.lane.b32.xlu0 %v38, 1
    %v42 = vpop.permute.xlu0 %41
    %v43 = vlaneseq
    %v44 = vand.u32 %v43, 127
    %v45 = vand.u32 %v44, 1
    %vm46 = vcmp.eq.s32.totalorder %v45, 0
    %s47 = sld [smem:[#allocation2]]
    %s48 = sld [smem:[#allocation2 + $0x1]]
    %s49 = sld [smem:[#allocation2 + $0x2]]
    %s50 = sld [smem:[#allocation2 + $0x3]]
    %v51 = vstv %s47
    %v52 = vmul.f32 %v38, %v51
    %v53 = vstv %s48
    %v54 = vmul.f32 %v40, %v53
    %v55 = vadd.f32 %v52, %v54
    %s56 = sld [smem:[#allocation6]]
    %v57 = vstv %s56
    %v58 = vadd.f32 %v55, %v57
    %v59 = vstv %s49
    %v60 = vmul.f32 %v42, %v59
    %v61 = vstv %s50
    %v62 = vmul.f32 %v38, %v61
    %v63 = vadd.f32 %v60, %v62
    %s64 = sld [smem:[#allocation6 + $0x1]]
    %v65 = vstv %s64
    %v66 = vadd.f32 %v63, %v65
    %v67 = vsel %vm46, %v58, %v66
    %68 = vst [vmem:[#allocation7] sm:$0x1] %v67
    // Predicated region
    $region22: #{tpu_custom_call.1} parent=1 // pred_check
      _
    $region23: #{tpu_custom_call.1} parent=1 // pred_check_branch
      %70 = sbr.rel (0) target = $region25
    $region24: #{tpu_custom_call.1} parent=1 // pred_region
      %s72 = ssub.s32 16, 16
      %73 = vsyncadd [#allocation3], %s72
      %s75 = sshll.u32 [#allocation7], 4
      %s76 = int_to_ptr.vmem [resolvable:$true] %s75
      %78 = dma.vmem_to_hbm [thread:$0]  %s76, 16, %s3, [#allocation3]
    $region25: #{tpu_custom_call.1} parent=1 // pred_fallthru
      _
    // Predicated region
    $region26: #{tpu_custom_call.1} parent=1 // pred_check
      _
    $region27: #{tpu_custom_call.1} parent=1 // pred_check_branch
      %80 = sbr.rel (0) target = $region29
    $region28: #{tpu_custom_call.1} parent=1 // pred_region
      %81 = dma.done [#allocation3], 16
    $region29: #{tpu_custom_call.1} parent=1 // pred_fallthru
      _
    %82 = vsyncpa [#allocation3], 1
    %83 = vsyncpa [#allocation4], 1
    %84 = vsyncpa [#allocation5], 1

</llo_original>
